<compile_context>
chip_gen: v5e
topology: v5e:2x2
jax: 0.10.0
libtpu: 0.0.40
codegen_flags: <defaults>
</compile_context>

<pallas_src>
import functools

import jax
import jax.numpy as jnp
from jax import lax
from jax.experimental import pallas as pl
from jax.experimental.pallas import tpu as pltpu


def _focal_loss_kernel(predict_ref, target_ref, alpha_ref, out_ref, *,
                       gamma, n_total, tile_n, final_scale):
    i = pl.program_id(0)

    @pl.when(i == 0)
    def _init():
        out_ref[...] = jnp.zeros_like(out_ref)

    tn, c = predict_ref.shape

    # Rows past n_total belong to the (partially out-of-bounds) trailing
    # block; their contents are unspecified, so sanitize before any math.
    row_ids = i * tile_n + lax.broadcasted_iota(jnp.int32, (tn, 1), 0)
    valid = row_ids < n_total                                   # (tn, 1) bool

    x = predict_ref[...].astype(jnp.float32)                    # (tn, C)
    x = jnp.where(valid, x, 0.0)

    # fused log-softmax over the class (lane) axis, PyTorch dim=1
    m = jnp.max(x, axis=1, keepdims=True)
    shifted = x - m
    lse = jnp.log(jnp.sum(jnp.exp(shifted), axis=1, keepdims=True))
    log_pt = shifted - lse                                      # (tn, C)

    # one-hot class mask built from an iota compare against target ids
    cls_ids = lax.broadcasted_iota(jnp.int32, (tn, c), 1)
    mask = (cls_ids == target_ref[...]).astype(jnp.float32)

    # true-class log-prob and alpha gather share the masked-reduce pattern
    log_p = jnp.sum(log_pt * mask, axis=1, keepdims=True)       # (tn, 1)
    alpha_row = jnp.sum(alpha_ref[...] * mask, axis=1, keepdims=True)

    probs = jnp.exp(log_p)
    one_minus_p = 1.0 - probs
    if float(gamma) == int(gamma):
        focal = lax.integer_pow(one_minus_p, int(gamma))        # VPU only
    else:
        focal = jnp.power(one_minus_p, jnp.float32(gamma))

    loss = -alpha_row * focal * log_p                           # (tn, 1)
    loss = jnp.where(valid, loss, 0.0)                          # drop OOB rows

    out_ref[...] += jnp.sum(loss, axis=0, keepdims=True)        # (1, 1)

    @pl.when(i == pl.num_programs(0) - 1)
    def _finalize():
        out_ref[...] = out_ref[...] * final_scale


def multi_ce_focal_loss(predict, target, alpha, gamma=2.0, reduction="mean"):
    """predict: (N, C), target: (N,) int, alpha: (C,) f32 -> scalar f32."""
    n, c = predict.shape
    itemsize = jnp.dtype(predict.dtype).itemsize

    # Tile sizing from the *padded* VMEM footprint: the class axis is padded
    # to 128 lanes in VMEM, and both the predict and target blocks are
    # double-buffered by the pipeline.  Budget 20 MiB of pipeline buffers
    # against an explicit 32 MiB scoped-VMEM limit (safe on v5e/v6e/v7x).
    lanes_c = ((c + 127) // 128) * 128
    row_bytes = 2 * (lanes_c * itemsize + 128 * 4)     # 2x = double buffering
    budget = 20 * 1024 * 1024
    tile_n = (budget // row_bytes) // 8 * 8
    tile_n = max(8, min(tile_n, 16384, ((n + 7) // 8) * 8))
    grid = (pl.cdiv(n, tile_n),)                       # ragged tail masked

    target2d = target.reshape(n, 1).astype(jnp.int32)
    alpha2d = alpha.reshape(1, c).astype(jnp.float32)

    final_scale = 1.0 / n if reduction == "mean" else 1.0   # 'sum' -> 1.0

    cost = pl.CostEstimate(
        flops=8 * n * c,
        transcendentals=n * c + 2 * n,
        bytes_accessed=n * c * itemsize + n * 4 + c * 4 + 4,
    )

    out = pl.pallas_call(
        functools.partial(_focal_loss_kernel, gamma=float(gamma),
                          n_total=n, tile_n=tile_n, final_scale=final_scale),
        out_shape=jax.ShapeDtypeStruct((1, 1), jnp.float32),
        grid=grid,
        in_specs=[
            pl.BlockSpec((tile_n, c), lambda i: (i, 0)),
            pl.BlockSpec((tile_n, 1), lambda i: (i, 0)),
            pl.BlockSpec((1, c), lambda i: (0, 0)),     # constant block: no re-DMA
        ],
        out_specs=pl.BlockSpec((1, 1), lambda i: (0, 0)),
        compiler_params=pltpu.CompilerParams(
            dimension_semantics=("arbitrary",),          # carried accumulator
            vmem_limit_bytes=32 * 1024 * 1024,
        ),
        cost_estimate=cost,
    )(predict, target2d, alpha2d)
    return out[0, 0]


def _reference(predict, target, alpha, gamma=2.0):
    pt = jax.nn.softmax(predict.astype(jnp.float32), axis=1)
    mask = jax.nn.one_hot(target, predict.shape[1], dtype=jnp.float32)
    probs = jnp.sum(pt * mask, axis=1, keepdims=True)
    a = alpha[target].reshape(-1, 1)
    loss = -a * jnp.power(1.0 - probs, gamma) * jnp.log(probs)
    return jnp.mean(loss)


if __name__ == "__main__":
    class_num = 4
    gamma = 2.0
    key = jax.random.PRNGKey(0)

    k1, k2, k3, k4 = jax.random.split(key, 4)
    # deterministic init, matches nn.Parameter(torch.ones(class_num, 1))
    alpha = jnp.ones((class_num,), dtype=jnp.float32)

    # case 1: small, exact-tile batch
    predict = jax.random.normal(k1, (8, class_num), dtype=jnp.float32)
    target = jax.random.randint(k2, (8,), 0, class_num, dtype=jnp.int32)
    loss = multi_ce_focal_loss(predict, target, alpha, gamma)
    jax.block_until_ready(loss)
    ref = _reference(predict, target, alpha, gamma)
    assert jnp.allclose(loss, ref, atol=1e-5, rtol=1e-5), (loss, ref)

    # case 2: ragged batch -> exercises the in-kernel partial-block masking
    predict2 = jax.random.normal(k3, (37, class_num), dtype=jnp.float32)
    target2 = jax.random.randint(k4, (37,), 0, class_num, dtype=jnp.int32)
    loss2 = multi_ce_focal_loss(predict2, target2, alpha, gamma)
    jax.block_until_ready(loss2)
    ref2 = _reference(predict2, target2, alpha, gamma)
    assert jnp.allclose(loss2, ref2, atol=1e-5, rtol=1e-5), (loss2, ref2)

    print("KERNEL_OK")
</pallas_src>

<mosaic_0001>
module attributes {stable_mosaic.version = 11 : i64} {
  func.func @_focal_loss_kernel(%arg0: i32, %arg1: memref<8x4xf32, #tpu.memory_space<vmem>>, %arg2: memref<8x1xi32, #tpu.memory_space<vmem>>, %arg3: memref<1x4xf32, #tpu.memory_space<vmem>>, %arg4: memref<1x1xf32, #tpu.memory_space<vmem>>) attributes {dimension_semantics = [#tpu.dimension_semantics<arbitrary>], iteration_bounds = array<i64: 1>, scalar_prefetch = 0 : i64, scratch_operands = 0 : i64, tpu.core_type = #tpu.core_type<tc>, window_params = [{transform_indices = @transform_0, window_bounds = array<i64: 8, 4>}, {transform_indices = @transform_1, window_bounds = array<i64: 8, 1>}, {pipeline_mode = #tpu.pipeline_mode<synchronous>, transform_indices = @transform_2, window_bounds = array<i64: 1, 4>}, {pipeline_mode = #tpu.pipeline_mode<synchronous>, transform_indices = @transform_3, window_bounds = array<i64: 1, 1>}]} {
    %c0_i32 = arith.constant 0 : i32
    %0 = arith.cmpi eq, %arg0, %c0_i32 : i32
    %1 = arith.extui %0 : i1 to i32
    %c0_i32_0 = arith.constant 0 : i32
    %2 = arith.cmpi ne, %1, %c0_i32_0 : i32
    scf.if %2 {
      %cst_21 = arith.constant 0.000000e+00 : f32
      %56 = vector.broadcast %cst_21 : f32 to vector<1x1xf32>
      %c0_22 = arith.constant 0 : index
      %c0_23 = arith.constant 0 : index
      %57 = vector.load %arg4[%c0_22, %c0_23] : memref<1x1xf32, #tpu.memory_space<vmem>>, vector<1x1xf32>
      tpu.vector_store %arg4[%c0_22, %c0_23], %56 {strides = array<i32>} : memref<1x1xf32, #tpu.memory_space<vmem>>, vector<1x1xf32>,
    } else {
    }
    %c8_i32 = arith.constant 8 : i32
    %3 = arith.muli %arg0, %c8_i32 : i32
    %4 = tpu.iota {dimensions = array<i32: 0>} : vector<8x1xi32>
    %5 = vector.broadcast %3 : i32 to vector<8x1xi32>
    %6 = arith.addi %5, %4 : vector<8x1xi32>
    %c8_i32_1 = arith.constant 8 : i32
    %7 = vector.broadcast %c8_i32_1 : i32 to vector<8x1xi32>
    %8 = arith.cmpi slt, %6, %7 : vector<8x1xi32>
    %c0 = arith.constant 0 : index
    %c0_2 = arith.constant 0 : index
    %9 = vector.load %arg1[%c0, %c0_2] : memref<8x4xf32, #tpu.memory_space<vmem>>, vector<8x4xf32>
    %cst = arith.constant 0.000000e+00 : f32
    %10 = vector.shape_cast %8 : vector<8x1xi1> to vector<8x1xi1>
    %11 = vector.broadcast %10 : vector<8x1xi1> to vector<8x4xi1>
    %12 = vector.broadcast %cst : f32 to vector<8x4xf32>
    %13 = arith.select %11, %9, %12 : vector<8x4xi1>, vector<8x4xf32>
    %cst_3 = arith.constant dense<0xFF800000> : vector<8xf32>
    %14 = vector.multi_reduction <maximumf>, %13, %cst_3 [1] : vector<8x4xf32> to vector<8xf32>
    %15 = vector.shape_cast %14 : vector<8xf32> to vector<8x1xf32>
    %16 = vector.broadcast %15 : vector<8x1xf32> to vector<8x4xf32>
    %17 = arith.subf %13, %16 : vector<8x4xf32>
    %18 = math.exp %17 : vector<8x4xf32>
    %cst_4 = arith.constant dense<0.000000e+00> : vector<8xf32>
    %19 = vector.multi_reduction <add>, %18, %cst_4 [1] : vector<8x4xf32> to vector<8xf32>
    %20 = vector.shape_cast %19 : vector<8xf32> to vector<8x1xf32>
    %21 = math.log %20 : vector<8x1xf32>
    %22 = vector.broadcast %21 : vector<8x1xf32> to vector<8x4xf32>
    %23 = arith.subf %17, %22 : vector<8x4xf32>
    %24 = tpu.iota {dimensions = array<i32: 1>} : vector<8x4xi32>
    %c0_5 = arith.constant 0 : index
    %c0_6 = arith.constant 0 : index
    %25 = vector.load %arg2[%c0_5, %c0_6] : memref<8x1xi32, #tpu.memory_space<vmem>>, vector<8x1xi32>
    %26 = vector.broadcast %25 : vector<8x1xi32> to vector<8x4xi32>
    %27 = arith.cmpi eq, %24, %26 : vector<8x4xi32>
    %28 = arith.extui %27 : vector<8x4xi1> to vector<8x4xi32>
    %29 = arith.sitofp %28 : vector<8x4xi32> to vector<8x4xf32>
    %30 = arith.mulf %23, %29 : vector<8x4xf32>
    %cst_7 = arith.constant dense<0.000000e+00> : vector<8xf32>
    %31 = vector.multi_reduction <add>, %30, %cst_7 [1] : vector<8x4xf32> to vector<8xf32>
    %32 = vector.shape_cast %31 : vector<8xf32> to vector<8x1xf32>
    %c0_8 = arith.constant 0 : index
    %c0_9 = arith.constant 0 : index
    %33 = vector.load %arg3[%c0_8, %c0_9] : memref<1x4xf32, #tpu.memory_space<vmem>>, vector<1x4xf32>
    %34 = vector.broadcast %33 : vector<1x4xf32> to vector<8x4xf32>
    %35 = arith.mulf %34, %29 : vector<8x4xf32>
    %cst_10 = arith.constant dense<0.000000e+00> : vector<8xf32>
    %36 = vector.multi_reduction <add>, %35, %cst_10 [1] : vector<8x4xf32> to vector<8xf32>
    %37 = vector.shape_cast %36 : vector<8xf32> to vector<8x1xf32>
    %38 = math.exp %32 : vector<8x1xf32>
    %cst_11 = arith.constant 1.000000e+00 : f32
    %39 = vector.broadcast %cst_11 : f32 to vector<8x1xf32>
    %40 = arith.subf %39, %38 : vector<8x1xf32>
    %41 = arith.mulf %40, %40 : vector<8x1xf32>
    %cst_12 = arith.constant 0.000000e+00 : f32
    %42 = vector.broadcast %cst_12 : f32 to vector<8x1xf32>
    %43 = arith.subf %42, %37 : vector<8x1xf32>
    %44 = arith.mulf %43, %41 : vector<8x1xf32>
    %45 = arith.mulf %44, %32 : vector<8x1xf32>
    %cst_13 = arith.constant 0.000000e+00 : f32
    %46 = vector.broadcast %cst_13 : f32 to vector<8x1xf32>
    %47 = arith.select %8, %45, %46 : vector<8x1xi1>, vector<8x1xf32>
    %c0_14 = arith.constant 0 : index
    %c0_15 = arith.constant 0 : index
    %48 = vector.load %arg4[%c0_14, %c0_15] : memref<1x1xf32, #tpu.memory_space<vmem>>, vector<1x1xf32>
    %cst_16 = arith.constant dense<0.000000e+00> : vector<1xf32>
    %49 = vector.multi_reduction <add>, %47, %cst_16 [0] : vector<8x1xf32> to vector<1xf32>
    %50 = vector.shape_cast %49 : vector<1xf32> to vector<1x1xf32>
    %51 = arith.addf %48, %50 : vector<1x1xf32>
    %c0_17 = arith.constant 0 : index
    %c0_18 = arith.constant 0 : index
    %52 = vector.load %arg4[%c0_17, %c0_18] : memref<1x1xf32, #tpu.memory_space<vmem>>, vector<1x1xf32>
    tpu.vector_store %arg4[%c0_17, %c0_18], %51 {strides = array<i32>} : memref<1x1xf32, #tpu.memory_space<vmem>>, vector<1x1xf32>,
    %c0_i32_19 = arith.constant 0 : i32
    %53 = arith.cmpi eq, %arg0, %c0_i32_19 : i32
    %54 = arith.extui %53 : i1 to i32
    %c0_i32_20 = arith.constant 0 : i32
    %55 = arith.cmpi ne, %54, %c0_i32_20 : i32
    scf.if %55 {
      %c0_21 = arith.constant 0 : index
      %c0_22 = arith.constant 0 : index
      %56 = vector.load %arg4[%c0_21, %c0_22] : memref<1x1xf32, #tpu.memory_space<vmem>>, vector<1x1xf32>
      %cst_23 = arith.constant 1.250000e-01 : f32
      %57 = vector.broadcast %cst_23 : f32 to vector<1x1xf32>
      %58 = arith.mulf %56, %57 : vector<1x1xf32>
      %c0_24 = arith.constant 0 : index
      %c0_25 = arith.constant 0 : index
      %59 = vector.load %arg4[%c0_24, %c0_25] : memref<1x1xf32, #tpu.memory_space<vmem>>, vector<1x1xf32>
      tpu.vector_store %arg4[%c0_24, %c0_25], %58 {strides = array<i32>} : memref<1x1xf32, #tpu.memory_space<vmem>>, vector<1x1xf32>,
    } else {
    }
    return
  }
  func.func @transform_0(%arg0: i32) -> (i32, i32) {
    %c0_i32 = arith.constant 0 : i32
    %c0_i32_0 = arith.constant 0 : i32
    return %arg0, %c0_i32 : i32, i32
  }
  func.func @transform_1(%arg0: i32) -> (i32, i32) {
    %c0_i32 = arith.constant 0 : i32
    %c0_i32_0 = arith.constant 0 : i32
    return %arg0, %c0_i32 : i32, i32
  }
  func.func @transform_2(%arg0: i32) -> (i32, i32) {
    %c0_i32 = arith.constant 0 : i32
    %c0_i32_0 = arith.constant 0 : i32
    %c0_i32_1 = arith.constant 0 : i32
    return %c0_i32, %c0_i32_0 : i32, i32
  }
  func.func @transform_3(%arg0: i32) -> (i32, i32) {
    %c0_i32 = arith.constant 0 : i32
    %c0_i32_0 = arith.constant 0 : i32
    %c0_i32_1 = arith.constant 0 : i32
    return %c0_i32, %c0_i32_0 : i32, i32
  }
}

</mosaic_0001>

<llo_original>
// kernel: tpu_custom_call.1
$region0: #{tpu_custom_call.1}
  #allocation0 [shape = 'u32[]', space=smem, size = 0x4, offset = 0x4, fixed_abs, tag = 'smem constant byte address 0x4 - core index']
  #allocation1 [shape = 'u32[72,128]{1,0:T(1,128)}', space=vmem, size = 0x9000, scoped, tag = 'internal scratch']
  %s0 = inlined_call_operand.vmem [shape: f32[8,4], index: 0, kind: input, shape index: {}]
  %s1 = inlined_call_operand.vmem [shape: s32[8,1], index: 1, kind: input, shape index: {}]
  %s2 = inlined_call_operand.vmem [shape: f32[1,4], index: 2, kind: input, shape index: {}]
  %s3 = inlined_call_operand.hbm [shape: f32[1,1], index: 3, kind: output, shape index: {}]
  %s4 = sld [smem:[#allocation0]]
  $region30: #{tpu_custom_call.1} parent=0
    _
  %s6 = ssub.s32 1, %s4
  %s7 = scalar_select 0, %s6, %s4
  $region1: #{tpu_custom_call.1} parent=0
    #allocation2 [shape = 'u8[512]{0}', space=vmem, size = 0x400, scoped, tag = 'output window, operand 0, single buffered']
    #allocation3 [shape = 's32[1]{0}', space=sflag, size = 0x4, scoped, tag = 'scoped memory for tpu_custom_call.1']
    %8 = vsyncpa [#allocation3], 0
    // Predicated region
    $region2: #{tpu_custom_call.1} parent=1 // pred_check
      _
    $region3: #{tpu_custom_call.1} parent=1 // pred_check_branch
      %10 = sbr.rel (0) target = $region5
    $region4: #{tpu_custom_call.1} parent=1 // pred_region
      _
    $region5: #{tpu_custom_call.1} parent=1 // pred_fallthru
      _
    // Predicated region
    $region6: #{tpu_custom_call.1} parent=1 // pred_check
      _
    $region7: #{tpu_custom_call.1} parent=1 // pred_check_branch
      %12 = sbr.rel (0) target = $region9
    $region8: #{tpu_custom_call.1} parent=1 // pred_region
      _
    $region9: #{tpu_custom_call.1} parent=1 // pred_fallthru
      _
    // Predicated region
    $region10: #{tpu_custom_call.1} parent=1 // pred_check
      _
    $region11: #{tpu_custom_call.1} parent=1 // pred_check_branch
      %14 = sbr.rel (0) target = $region13
    $region12: #{tpu_custom_call.1} parent=1 // pred_region
      _
    $region13: #{tpu_custom_call.1} parent=1 // pred_fallthru
      _
    %p15 = scmp.eq.s32.totalorder 0, 0
    // Predicated region
    $region14: #{tpu_custom_call.1} parent=1 // pred_check
      %p16 = pneg %p15
    $region15: #{tpu_custom_call.1} parent=1 // pred_check_branch
      %18 = sbr.rel (%p16) target = $region17
    $region16: #{tpu_custom_call.1} parent=1 // pred_region
      %vm19 = vcmask 0
      %20 = vst.msk [vmem:[#allocation2] sm:$0x1] %vm19, 0.0
    $region17: #{tpu_custom_call.1} parent=1 // pred_fallthru
      _
    %s21 = smul.u32 0, 8
    %v22 = vlaneseq
    %v23 = vshrl.u32 %v22, 7
    %v24 = vstv %s21
    %v25 = vadd.s32 %v24, %v23
    %vm26 = vcmp.lt.s32.totalorder %v25, 8
    %v27 = vld [vmem:[%s0] sm:$0xff]
    %v28 = vsel %vm26, 1, 0
    %vm29 = vcmp.eq.s32.totalorder %v28, 1
    %v30 = vsel %vm29, %v27, 0.0
    %vm31 = vcmask 31744
    %v32 = vsel %vm31, %v30, -inf
    %33 = vmax.xlane.f32.xlu0 %v32
    %v34 = vpop.xlane.xlu0 %33
    %v35 = vsub.f32 %v30, %v34
    %v36 = vmul.f32 %v35, 1.442695
    %v37 = vpow.pop %v36
    %v38 = vsel %vm31, %v37, 0.0
    %39 = vadd.xlane.f32.xlu0 %v38
    %v40 = vpop.xlane.xlu0 %39
    %v41 = vlog2.pop %v40
    %v42 = vmul.f32 %v41, 0.6931472
    %v43 = vsub.f32 %v35, %v42
    %v44 = vlaneseq
    %v45 = vand.u32 %v44, 127
    %v46 = vld [vmem:[%s1] sm:$0xff]
    %47 = vset.pattern.permute.xlu0 0
    %48 = vperm.xlu0 %47, %v46
    %v49 = vpop.permute.xlu0 %48
    %vm50 = vcmp.eq.s32.totalorder %v45, %v49
    %v51 = vsel %vm50, 1, 0
    %v52 = vcvt.s32.f32 %v51
    %v53 = vmul.f32 %v43, %v52
    %v54 = vsel %vm31, %v53, 0.0
    %55 = vadd.xlane.f32.xlu0 %v54
    %v56 = vpop.xlane.xlu0 %55
    %v57 = vld [vmem:[%s2] sm:$0x1]
    %v59 = vperm.slane %v57, 0
    %v61 = vmul.f32 %v59, %v52
    %v62 = vsel %vm31, %v61, 0.0
    %63 = vadd.xlane.f32.xlu0 %v62
    %v64 = vpop.xlane.xlu0 %63
    %v65 = vmul.f32 %v56, 1.442695
    %v66 = vpow.pop %v65
    %v67 = vsub.f32 1.0, %v66
    %v68 = vmul.f32 %v67, %v67
    %v69 = vsub.f32 0.0, %v64
    %v70 = vmul.f32 %v69, %v68
    %v71 = vmul.f32 %v70, %v56
    %v72 = vsel %vm26, %v71, 0.0
    %v73 = vld [vmem:[#allocation2] sm:$0x1]
    %v74 = vrot.slane %v72, 4
    %v75 = vadd.f32 %v72, %v74
    %v76 = vrot.slane %v75, 2
    %v77 = vadd.f32 %v75, %v76
    %v78 = vrot.slane %v77, 1
    %v79 = vadd.f32 %v77, %v78
    %v80 = vadd.f32 %v73, %v79
    %vm81 = vcmask 0
    %82 = vst.msk [vmem:[#allocation2] sm:$0x1] %vm81, %v80
    // Predicated region
    $region18: #{tpu_custom_call.1} parent=1 // pred_check
      %p83 = pneg %p15
    $region19: #{tpu_custom_call.1} parent=1 // pred_check_branch
      %85 = sbr.rel (%p83) target = $region21
    $region20: #{tpu_custom_call.1} parent=1 // pred_region
      %v86 = vld [vmem:[#allocation2] sm:$0x1]
      %v87 = vmul.f32 %v86, 0.125
      %88 = vst.msk [vmem:[#allocation2] sm:$0x1] %vm81, %v87
    $region21: #{tpu_custom_call.1} parent=1 // pred_fallthru
      _
    // Predicated region
    $region22: #{tpu_custom_call.1} parent=1 // pred_check
      _
    $region23: #{tpu_custom_call.1} parent=1 // pred_check_branch
      %90 = sbr.rel (0) target = $region25
    $region24: #{tpu_custom_call.1} parent=1 // pred_region
      %92 = vsyncadd [#allocation3], 0
      %s94 = sshll.u32 [#allocation2], 4
      %s95 = int_to_ptr.vmem [resolvable:$true] %s94
      %s96 = sshll.u32 %s3, 4
      %s97 = int_to_ptr.hbm [resolvable:$true] %s96
      %99 = dma.vmem_to_hbm [thread:$0]  %s95, 16, %s97, [#allocation3]
    $region25: #{tpu_custom_call.1} parent=1 // pred_fallthru
      _
    // Predicated region
    $region26: #{tpu_custom_call.1} parent=1 // pred_check
      _
    $region27: #{tpu_custom_call.1} parent=1 // pred_check_branch
      %101 = sbr.rel (0) target = $region29
    $region28: #{tpu_custom_call.1} parent=1 // pred_region
      %103 = dma.done [#allocation3], 16
    $region29: #{tpu_custom_call.1} parent=1 // pred_fallthru
      _
    %104 = vsyncpa [#allocation3], 1

</llo_original>
